<compile_context>
chip_gen: v7x
topology: tpu7x:2x2x1
jax: 0.10.0
libtpu: 0.0.40
codegen_flags: <defaults>
</compile_context>

<pallas_src>
import functools

import jax
import jax.numpy as jnp
from jax import lax
from jax.experimental import pallas as pl
from jax.experimental.pallas import tpu as pltpu

_LANES = 128
_TARGET_BLOCK_BYTES = 4 * 1024 * 1024   # ~4 MiB per input block
_VMEM_LIMIT_BYTES = 40 << 20            # explicit scoped-VMEM limit


def _round_up(x, m):
    return ((x + m - 1) // m) * m


def _pick_row_tile(rows: int, dtype) -> int:
    """Prefer 8 rows (f32) / 16 rows (bf16) so one time-chunk == one vreg and
    the unrolled inner loop stays far from register spills."""
    base = 16 if jnp.dtype(dtype).itemsize == 2 else 8
    if rows >= base and rows % base == 0:
        return base
    if rows >= 8 and rows % 8 == 0:
        return 8
    return rows  # full-extent block dim is always legal


def _pick_time_tile(t: int, row_tile: int, itemsize: int,
                    want_split: bool) -> int:
    """Time tile: multiple of 128, ~4 MiB per input block; if the row axis has
    only one block, cap the tile so the time range yields >=2 blocks and the
    leading 'parallel' split axis can feed both v7x TensorCores."""
    t_pad = _round_up(t, _LANES)
    cap = _TARGET_BLOCK_BYTES // (row_tile * itemsize)
    cap = max(_LANES, (cap // _LANES) * _LANES)
    tile = min(t_pad, cap)
    if want_split and t_pad >= 2 * _LANES:
        tile = min(tile, _round_up((t + 1) // 2, _LANES))
    return tile


def _snr_energy_kernel(s1_ref, st_ref, te_ref, ne_ref, *, t_valid, t_tile,
                       n_tb_per_split, needs_mask):
    """Accumulate lane-wise partial energies over the time axis:
       te += target^2 per 128-lane chunk, ne += (pred - target)^2."""
    h = pl.program_id(0)          # split index (time halves)
    t = pl.program_id(2)          # time block within this split

    @pl.when(t == 0)
    def _():
        te_ref[...] = jnp.zeros_like(te_ref)
        ne_ref[...] = jnp.zeros_like(ne_ref)

    rows = te_ref.shape[0]
    n_chunks = t_tile // _LANES
    block_start = (h * n_tb_per_split + t) * t_tile   # global time offset

    def run(masked):
        if masked:
            # Hoisted out of the fori_loop body (loop-invariant).
            pos = (lax.broadcasted_iota(jnp.int32, (rows, _LANES), 1)
                   + block_start)

        def body(k, carry):
            te_acc, ne_acc = carry
            off = pl.multiple_of(k * _LANES, _LANES)
            st_k = st_ref[:, pl.ds(off, _LANES)].astype(jnp.float32)
            nz_k = s1_ref[:, pl.ds(off, _LANES)].astype(jnp.float32) - st_k
            if masked:
                valid = (pos + off) < t_valid
                st_k = jnp.where(valid, st_k, 0.0)
                nz_k = jnp.where(valid, nz_k, 0.0)
            return te_acc + st_k * st_k, ne_acc + nz_k * nz_k

        te_acc, ne_acc = lax.fori_loop(
            0, n_chunks, body, (te_ref[...], ne_ref[...]),
            unroll=min(8, n_chunks))
        te_ref[...] = te_acc
        ne_ref[...] = ne_acc

    if not needs_mask:
        run(masked=False)
    else:
        # Mask only on the (rare) partial / padded blocks; steady-state blocks
        # take the cheap unmasked path.
        full = (block_start + t_tile) <= t_valid

        @pl.when(full)
        def _():
            run(masked=False)

        @pl.when(jnp.logical_not(full))
        def _():
            run(masked=True)


def si_snr_loss(model_output, targets, eps=1e-8, time_tile=None):
    """Pallas implementation of Loss(loss_mode='SI-SNR').forward:
       +mean_{B,C}[ 10*log10((sum_t tgt^2 + eps) / (sum_t (pred-tgt)^2 + eps)) ]."""
    assert model_output.shape == targets.shape
    assert model_output.ndim == 3, "expected (batch, channels, time)"
    B, C, T = model_output.shape
    rows = B * C

    # (B, C, T) -> (B*C, T): fills sublanes, keeps time on lanes. Free reshape.
    s1 = model_output.reshape(rows, T)
    st = targets.reshape(rows, T)

    itemsize = jnp.dtype(s1.dtype).itemsize
    row_tile = _pick_row_tile(rows, s1.dtype)
    n_row_blocks = rows // row_tile
    want_split = (n_row_blocks == 1)

    if time_tile is None:
        t_tile = _pick_time_tile(T, row_tile, itemsize, want_split)
    else:
        assert time_tile % _LANES == 0
        t_tile = time_tile

    n_tb = pl.cdiv(T, t_tile)                       # real time blocks
    n_splits = 2 if (want_split and n_tb >= 2) else 1
    n_tb_per_split = pl.cdiv(n_tb, n_splits)
    padded_blocks = (n_splits * n_tb_per_split) != n_tb
    needs_mask = (T % t_tile != 0) or padded_blocks

    def time_block_index(h, t):
        gb = h * n_tb_per_split + t
        if padded_blocks:
            # Clamp the one padded block to a valid DMA source; the kernel
            # masks its contribution to zero via the global-position check.
            gb = jnp.minimum(gb, n_tb - 1)
        return gb

    in_spec = pl.BlockSpec((row_tile, t_tile),
                           lambda h, r, t: (r, time_block_index(h, t)))
    out_spec = pl.BlockSpec((None, row_tile, _LANES),
                            lambda h, r, t: (h, r, 0))

    kernel = functools.partial(
        _snr_energy_kernel, t_valid=T, t_tile=t_tile,
        n_tb_per_split=n_tb_per_split, needs_mask=needs_mask)

    te, ne = pl.pallas_call(
        kernel,
        out_shape=(
            jax.ShapeDtypeStruct((n_splits, rows, _LANES), jnp.float32),
            jax.ShapeDtypeStruct((n_splits, rows, _LANES), jnp.float32),
        ),
        grid_spec=pltpu.PrefetchScalarGridSpec(
            num_scalar_prefetch=0,
            grid=(n_splits, n_row_blocks, n_tb_per_split),
            in_specs=[in_spec, in_spec],
            out_specs=(out_spec, out_spec),
        ),
        compiler_params=pltpu.CompilerParams(
            dimension_semantics=("parallel", "parallel", "arbitrary"),
            vmem_limit_bytes=_VMEM_LIMIT_BYTES),
        cost_estimate=pl.CostEstimate(
            flops=5 * rows * T,
            transcendentals=0,
            bytes_accessed=(2 * rows * T * itemsize
                            + 2 * n_splits * rows * _LANES * 4)),
    )(s1, st)

    # Tiny finalize (O(n_splits * B*C * 128)): sum split-halves + lanes,
    # eps added exactly once, log10, mean over channels+batch == mean over rows.
    target_energy = jnp.sum(te, axis=(0, 2)) + eps     # (B*C,)
    noise_energy = jnp.sum(ne, axis=(0, 2)) + eps      # (B*C,)
    snr_db = 10.0 * jnp.log10(target_energy / noise_energy)
    # forward() = -snr_loss(...) = +mean(snr_db)
    return jnp.mean(snr_db)


def _si_snr_loss_ref(model_output, targets, eps=1e-8):
    """Pure-JAX reference mirroring the PyTorch code path."""
    s1 = model_output.astype(jnp.float32)
    st = targets.astype(jnp.float32)
    noise = s1 - st
    te = jnp.sum(st ** 2, axis=-1) + eps
    ne = jnp.sum(noise ** 2, axis=-1) + eps
    snr = 10.0 * jnp.log10(te / ne)        # (B, C)
    snr = jnp.mean(snr, axis=1)            # mean over channels
    return jnp.mean(snr)                   # forward = -(-mean) = +mean


# TODO(synk): only the 'SI-SNR' branch of Loss.forward is implemented; the MSE /
# MAE / STOI-SNR branches depend on Stft and NegSTOILoss and are out of scope.

if __name__ == "__main__":
    key = jax.random.PRNGKey(0)
    k1, k2 = jax.random.split(key)
    B, C = 2, 4

    # Primary test: (batch, channels, time) = (2, 4, 256); exercises the
    # 2-way time split (both v7x cores) with the unmasked steady-state path.
    T = 256
    targets = jax.random.normal(k1, (B, C, T), dtype=jnp.float32)
    model_output = targets + 0.1 * jax.random.normal(k2, (B, C, T),
                                                     dtype=jnp.float32)
    loss = jax.block_until_ready(si_snr_loss(model_output, targets))
    ref = _si_snr_loss_ref(model_output, targets)
    assert jnp.allclose(loss, ref, rtol=1e-4, atol=1e-4), (loss, ref)

    # Non-128-multiple time length: exercises the masked last-block path.
    T2 = 300
    targets2 = jax.random.normal(k1, (B, C, T2), dtype=jnp.float32)
    model_output2 = targets2 + 0.1 * jax.random.normal(k2, (B, C, T2),
                                                       dtype=jnp.float32)
    loss2 = jax.block_until_ready(si_snr_loss(model_output2, targets2))
    ref2 = _si_snr_loss_ref(model_output2, targets2)
    assert jnp.allclose(loss2, ref2, rtol=1e-4, atol=1e-4), (loss2, ref2)

    # Odd block count + tail: exercises the clamped padded block and tail mask.
    T3 = 600
    targets3 = jax.random.normal(k1, (B, C, T3), dtype=jnp.float32)
    model_output3 = targets3 + 0.1 * jax.random.normal(k2, (B, C, T3),
                                                       dtype=jnp.float32)
    loss3 = jax.block_until_ready(
        si_snr_loss(model_output3, targets3, time_tile=256))
    ref3 = _si_snr_loss_ref(model_output3, targets3)
    assert jnp.allclose(loss3, ref3, rtol=1e-4, atol=1e-4), (loss3, ref3)

    print("KERNEL_OK")
</pallas_src>

<mosaic_0001>
module attributes {stable_mosaic.version = 11 : i64} {
  func.func @_snr_energy_kernel(%arg0: i32, %arg1: i32, %arg2: i32, %arg3: memref<8x128xf32, #tpu.memory_space<vmem>>, %arg4: memref<8x128xf32, #tpu.memory_space<vmem>>, %arg5: memref<1x8x128xf32, #tpu.memory_space<vmem>>, %arg6: memref<1x8x128xf32, #tpu.memory_space<vmem>>) attributes {dimension_semantics = [#tpu.dimension_semantics<parallel>, #tpu.dimension_semantics<parallel>, #tpu.dimension_semantics<arbitrary>], iteration_bounds = array<i64: 2, 1, 1>, scalar_prefetch = 0 : i64, scratch_operands = 0 : i64, tpu.core_type = #tpu.core_type<tc>, window_params = [{transform_indices = @transform_0, window_bounds = array<i64: 8, 128>}, {transform_indices = @transform_1, window_bounds = array<i64: 8, 128>}, {transform_indices = @transform_2, window_bounds = array<i64: 1, 8, 128>}, {transform_indices = @transform_3, window_bounds = array<i64: 1, 8, 128>}]} {
    %c0_i32 = arith.constant 0 : i32
    %0 = arith.cmpi eq, %arg2, %c0_i32 : i32
    %1 = arith.extui %0 : i1 to i32
    %c0_i32_0 = arith.constant 0 : i32
    %2 = arith.cmpi ne, %1, %c0_i32_0 : i32
    scf.if %2 {
      %cst = arith.constant 0.000000e+00 : f32
      %24 = vector.broadcast %cst : f32 to vector<8x128xf32>
      %c0_15 = arith.constant 0 : index
      %c0_16 = arith.constant 0 : index
      %c0_17 = arith.constant 0 : index
      %25 = vector.load %arg5[%c0_15, %c0_16, %c0_17] : memref<1x8x128xf32, #tpu.memory_space<vmem>>, vector<1x8x128xf32>
      %26 = vector.shape_cast %25 : vector<1x8x128xf32> to vector<8x128xf32>
      %27 = vector.shape_cast %24 : vector<8x128xf32> to vector<1x8x128xf32>
      tpu.vector_store %arg5[%c0_15, %c0_16, %c0_17], %27 {strides = array<i32>} : memref<1x8x128xf32, #tpu.memory_space<vmem>>, vector<1x8x128xf32>,
      %cst_18 = arith.constant 0.000000e+00 : f32
      %28 = vector.broadcast %cst_18 : f32 to vector<8x128xf32>
      %c0_19 = arith.constant 0 : index
      %c0_20 = arith.constant 0 : index
      %c0_21 = arith.constant 0 : index
      %29 = vector.load %arg6[%c0_19, %c0_20, %c0_21] : memref<1x8x128xf32, #tpu.memory_space<vmem>>, vector<1x8x128xf32>
      %30 = vector.shape_cast %29 : vector<1x8x128xf32> to vector<8x128xf32>
      %31 = vector.shape_cast %28 : vector<8x128xf32> to vector<1x8x128xf32>
      tpu.vector_store %arg6[%c0_19, %c0_20, %c0_21], %31 {strides = array<i32>} : memref<1x8x128xf32, #tpu.memory_space<vmem>>, vector<1x8x128xf32>,
    } else {
    }
    %c0 = arith.constant 0 : index
    %c0_1 = arith.constant 0 : index
    %c0_2 = arith.constant 0 : index
    %3 = vector.load %arg5[%c0, %c0_1, %c0_2] : memref<1x8x128xf32, #tpu.memory_space<vmem>>, vector<1x8x128xf32>
    %4 = vector.shape_cast %3 : vector<1x8x128xf32> to vector<8x128xf32>
    %c0_3 = arith.constant 0 : index
    %c0_4 = arith.constant 0 : index
    %c0_5 = arith.constant 0 : index
    %5 = vector.load %arg6[%c0_3, %c0_4, %c0_5] : memref<1x8x128xf32, #tpu.memory_space<vmem>>, vector<1x8x128xf32>
    %6 = vector.shape_cast %5 : vector<1x8x128xf32> to vector<8x128xf32>
    %c0_i32_6 = arith.constant 0 : i32
    %c128_i32 = arith.constant 128 : i32
    %7 = arith.muli %c0_i32_6, %c128_i32 : i32
    %8 = tpu.assume_multiple %7, 128 : i32
    %c0_7 = arith.constant 0 : index
    %9 = arith.index_cast %8 : i32 to index
    %10 = vector.load %arg4[%c0_7, %9] : memref<8x128xf32, #tpu.memory_space<vmem>>, vector<8x128xf32>
    %c0_8 = arith.constant 0 : index
    %11 = arith.index_cast %8 : i32 to index
    %12 = vector.load %arg3[%c0_8, %11] : memref<8x128xf32, #tpu.memory_space<vmem>>, vector<8x128xf32>
    %13 = arith.subf %12, %10 : vector<8x128xf32>
    %14 = arith.mulf %10, %10 : vector<8x128xf32>
    %15 = arith.addf %4, %14 : vector<8x128xf32>
    %16 = arith.mulf %13, %13 : vector<8x128xf32>
    %17 = arith.addf %6, %16 : vector<8x128xf32>
    %c1_i32 = arith.constant 1 : i32
    %c0_9 = arith.constant 0 : index
    %c0_10 = arith.constant 0 : index
    %c0_11 = arith.constant 0 : index
    %18 = vector.load %arg5[%c0_9, %c0_10, %c0_11] : memref<1x8x128xf32, #tpu.memory_space<vmem>>, vector<1x8x128xf32>
    %19 = vector.shape_cast %18 : vector<1x8x128xf32> to vector<8x128xf32>
    %20 = vector.shape_cast %15 : vector<8x128xf32> to vector<1x8x128xf32>
    tpu.vector_store %arg5[%c0_9, %c0_10, %c0_11], %20 {strides = array<i32>} : memref<1x8x128xf32, #tpu.memory_space<vmem>>, vector<1x8x128xf32>,
    %c0_12 = arith.constant 0 : index
    %c0_13 = arith.constant 0 : index
    %c0_14 = arith.constant 0 : index
    %21 = vector.load %arg6[%c0_12, %c0_13, %c0_14] : memref<1x8x128xf32, #tpu.memory_space<vmem>>, vector<1x8x128xf32>
    %22 = vector.shape_cast %21 : vector<1x8x128xf32> to vector<8x128xf32>
    %23 = vector.shape_cast %17 : vector<8x128xf32> to vector<1x8x128xf32>
    tpu.vector_store %arg6[%c0_12, %c0_13, %c0_14], %23 {strides = array<i32>} : memref<1x8x128xf32, #tpu.memory_space<vmem>>, vector<1x8x128xf32>,
    return
  }
  func.func @transform_0(%arg0: i32, %arg1: i32, %arg2: i32) -> (i32, i32) {
    %c1_i32 = arith.constant 1 : i32
    %0 = arith.muli %arg0, %c1_i32 : i32
    %1 = arith.addi %0, %arg2 : i32
    %c0_i32 = arith.constant 0 : i32
    return %arg1, %1 : i32, i32
  }
  func.func @transform_1(%arg0: i32, %arg1: i32, %arg2: i32) -> (i32, i32) {
    %c1_i32 = arith.constant 1 : i32
    %0 = arith.muli %arg0, %c1_i32 : i32
    %1 = arith.addi %0, %arg2 : i32
    %c0_i32 = arith.constant 0 : i32
    return %arg1, %1 : i32, i32
  }
  func.func @transform_2(%arg0: i32, %arg1: i32, %arg2: i32) -> (i32, i32, i32) {
    %c0_i32 = arith.constant 0 : i32
    %c0_i32_0 = arith.constant 0 : i32
    return %arg0, %arg1, %c0_i32 : i32, i32, i32
  }
  func.func @transform_3(%arg0: i32, %arg1: i32, %arg2: i32) -> (i32, i32, i32) {
    %c0_i32 = arith.constant 0 : i32
    %c0_i32_0 = arith.constant 0 : i32
    return %arg0, %arg1, %c0_i32 : i32, i32, i32
  }
}

</mosaic_0001>

<llo_original>
// kernel: tpu_custom_call.1
$region0: #{tpu_custom_call.1}
  #allocation0 [shape = 'u32[]', space=smem, size = 0x4, offset = 0x4, fixed_abs, tag = 'smem constant byte address 0x4 - core index']
  #allocation1 [shape = 'u32[144,128]{1,0:T(1,128)}', space=vmem, size = 0x12000, scoped, tag = 'internal scratch']
  %s0 = inlined_call_operand.hbm [shape: f32[8,256], index: 0, kind: input, shape index: {}]
  %s1 = inlined_call_operand.hbm [shape: f32[8,256], index: 1, kind: input, shape index: {}]
  %s2 = inlined_call_operand.hbm [shape: f32[2,8,128], index: 2, kind: output, shape index: {0}]
  %s3 = inlined_call_operand.hbm [shape: f32[2,8,128], index: 3, kind: output, shape index: {1}]
  %4 = xla_tuple %s2, %s3
  %s5 = sld [smem:[#allocation0]]
  $region61: #{tpu_custom_call.1} parent=0
    _
  %s7 = ssub.s32 1, %s5
  %s8 = scalar_select 0, %s7, %s5
  $region1: #{tpu_custom_call.1} parent=0
    #allocation2 [shape = 'u8[8192]{0}', space=vmem, size = 0x2000, scoped, tag = 'input window, operand 0']
    #allocation3 [shape = 's32[2]{0}', space=sflag, size = 0x8, scoped, tag = 'scoped memory for tpu_custom_call.1']
    #allocation4 [shape = 's32[2]{0}', space=sflag, size = 0x8, scoped, tag = 'scoped memory for tpu_custom_call.1']
    #allocation5 [shape = 'u8[8192]{0}', space=vmem, size = 0x2000, scoped, tag = 'input window, operand 1']
    #allocation6 [shape = 's32[2]{0}', space=sflag, size = 0x8, scoped, tag = 'scoped memory for tpu_custom_call.1']
    #allocation7 [shape = 'u8[8192]{0}', space=vmem, size = 0x2000, scoped, tag = 'output window, operand 0']
    #allocation8 [shape = 'u8[8192]{0}', space=vmem, size = 0x2000, scoped, tag = 'output window, operand 1']
    #allocation9 [shape = 's32[2]{0}', space=sflag, size = 0x8, scoped, tag = 'scoped memory for tpu_custom_call.1']
    %9 = vsyncpa [#allocation3], 0
    %s10 = scalar_lea.sflag [#allocation3], 1
    %11 = vsyncpa %s10, 0
    %12 = vsyncpa [#allocation6], 0
    %s13 = scalar_lea.sflag [#allocation6], 1
    %14 = vsyncpa %s13, 0
    %15 = vsyncpa [#allocation4], 0
    %s16 = scalar_lea.sflag [#allocation4], 1
    %17 = vsyncpa %s16, 0
    %18 = vsyncpa [#allocation9], 0
    %s19 = scalar_lea.sflag [#allocation9], 1
    %20 = vsyncpa %s19, 0
    loop: start=0, step=1, limit=4
    $region2: #{tpu_custom_call.1} parent=1 // loop_pre_header
      _
    $region3: #{tpu_custom_call.1} parent=1 // loop_header
      %s22 = sphi 0, %s26
      %p23 = scmp.ge.s32.totalorder %s22, 4
      %s29 = sphi 0, %s48
      %s30 = sphi 0, %s44
      %s31 = sphi 0, %s40
      %s32 = sphi 0, %s29
      %s33 = sphi 0, %s30
      %s34 = sphi 0, %s31
      %s35 = sphi 0, %s32
      %s36 = sphi 0, %s33
      %s37 = sphi 0, %s34
      %s55 = sphi 0, %s57
      %s58 = sphi 0, %s55
      %s59 = sphi 0, %s58
      %s75 = sphi 0, %s59
      %s85 = sphi 0, %s87
      %s88 = sphi 0, %s85
      %s89 = sphi 0, %s88
      %s105 = sphi 0, %s89
      %s113 = sphi 0, %s115
      %s116 = sphi 0, %s113
      %s117 = sphi 0, %s116
      %s133 = sphi 0, %s117
      %s141 = sphi 0, %s143
      %s144 = sphi 0, %s141
      %s145 = sphi 0, %s144
      %s161 = sphi 0, %s145
    $region4: #{tpu_custom_call.1} parent=1 // loop_header_branch
      %25 = sbr.rel (%p23) target = $region8
    $region5: #{tpu_custom_call.1} parent=1 // loop_body
      %s27 = ssub.s32 %s22, 1
      %s28 = ssub.s32 %s22, 2
      %s38 = sadd.s32 1, %s31
      %p39 = scmp.ge.s32.totalorder %s38, 1
      %s40 = scalar_select %p39, 0, %s38
      %s41 = sadd.s32 1, %s30
      %s42 = scalar_select %p39, %s41, %s30
      %p43 = scmp.ge.s32.totalorder %s42, 1
      %s44 = scalar_select %p43, 0, %s42
      %s45 = sadd.s32 1, %s29
      %s46 = scalar_select %p43, %s45, %s29
      %p47 = scmp.ge.s32.totalorder %s46, 2
      %s48 = scalar_select %p47, 0, %s46
      %s49 = sadd.s32 %s29, %s31
      %s50 = sadd.s32 %s48, %s40
      %s51 = ssub.s32 %s30, %s44
      %s52 = ssub.s32 %s49, %s50
      %s53 = sor.u32 %s51, %s52
      %p54 = scmp.eq.s32.totalorder %s53, 0
      %s56 = sadd.s32 %s55, 1
      %s57 = scalar_select %p54, %s55, %s56
      %p60 = pneg %p54
      %p61 = scmp.eq.s32.totalorder %s22, 1
      %p62 = por %p60, %p61
      %p63 = scmp.ne.s32.totalorder %s55, %s58
      %p64 = scmp.eq.s32.totalorder %s22, 0
      %p65 = por %p63, %p64
      %p66 = scmp.ne.s32.totalorder %s55, %s58
      %p67 = scmp.eq.s32.totalorder %s27, 1
      %p68 = por %p66, %p67
      %p69 = scmp.ne.s32.totalorder %s58, %s59
      %p70 = scmp.eq.s32.totalorder %s27, 0
      %p71 = por %p69, %p70
      %p72 = scmp.ne.s32.totalorder %s58, %s59
      %p73 = scmp.eq.s32.totalorder %s28, 1
      %p74 = por %p72, %p73
      %p76 = scmp.ne.s32.totalorder %s59, %s75
      %p77 = scmp.eq.s32.totalorder %s28, 0
      %p78 = por %p76, %p77
      %s79 = sadd.s32 %s29, %s31
      %s80 = sadd.s32 %s48, %s40
      %s81 = ssub.s32 %s30, %s44
      %s82 = ssub.s32 %s79, %s80
      %s83 = sor.u32 %s81, %s82
      %p84 = scmp.eq.s32.totalorder %s83, 0
      %s86 = sadd.s32 %s85, 1
      %s87 = scalar_select %p84, %s85, %s86
      %p90 = pneg %p84
      %p91 = scmp.eq.s32.totalorder %s22, 1
      %p92 = por %p90, %p91
      %p93 = scmp.ne.s32.totalorder %s85, %s88
      %p94 = scmp.eq.s32.totalorder %s22, 0
      %p95 = por %p93, %p94
      %p96 = scmp.ne.s32.totalorder %s85, %s88
      %p97 = scmp.eq.s32.totalorder %s27, 1
      %p98 = por %p96, %p97
      %p99 = scmp.ne.s32.totalorder %s88, %s89
      %p100 = scmp.eq.s32.totalorder %s27, 0
      %p101 = por %p99, %p100
      %p102 = scmp.ne.s32.totalorder %s88, %s89
      %p103 = scmp.eq.s32.totalorder %s28, 1
      %p104 = por %p102, %p103
      %p106 = scmp.ne.s32.totalorder %s89, %s105
      %p107 = scmp.eq.s32.totalorder %s28, 0
      %p108 = por %p106, %p107
      %s109 = ssub.s32 %s29, %s48
      %s110 = ssub.s32 %s30, %s44
      %s111 = sor.u32 %s109, %s110
      %p112 = scmp.eq.s32.totalorder %s111, 0
      %s114 = sadd.s32 %s113, 1
      %s115 = scalar_select %p112, %s113, %s114
      %p118 = pneg %p112
      %p119 = scmp.eq.s32.totalorder %s22, 1
      %p120 = por %p118, %p119
      %p121 = scmp.ne.s32.totalorder %s113, %s116
      %p122 = scmp.eq.s32.totalorder %s22, 0
      %p123 = por %p121, %p122
      %p124 = scmp.ne.s32.totalorder %s113, %s116
      %p125 = scmp.eq.s32.totalorder %s27, 1
      %p126 = por %p124, %p125
      %p127 = scmp.ne.s32.totalorder %s116, %s117
      %p128 = scmp.eq.s32.totalorder %s27, 0
      %p129 = por %p127, %p128
      %p130 = scmp.ne.s32.totalorder %s116, %s117
      %p131 = scmp.eq.s32.totalorder %s28, 1
      %p132 = por %p130, %p131
      %p134 = scmp.ne.s32.totalorder %s117, %s133
      %p135 = scmp.eq.s32.totalorder %s28, 0
      %p136 = por %p134, %p135
      %s137 = ssub.s32 %s29, %s48
      %s138 = ssub.s32 %s30, %s44
      %s139 = sor.u32 %s137, %s138
      %p140 = scmp.eq.s32.totalorder %s139, 0
      %s142 = sadd.s32 %s141, 1
      %s143 = scalar_select %p140, %s141, %s142
      %p146 = pneg %p140
      %p147 = scmp.eq.s32.totalorder %s22, 1
      %p148 = por %p146, %p147
      %p149 = scmp.ne.s32.totalorder %s141, %s144
      %p150 = scmp.eq.s32.totalorder %s22, 0
      %p151 = por %p149, %p150
      %p152 = scmp.ne.s32.totalorder %s141, %s144
      %p153 = scmp.eq.s32.totalorder %s27, 1
      %p154 = por %p152, %p153
      %p155 = scmp.ne.s32.totalorder %s144, %s145
      %p156 = scmp.eq.s32.totalorder %s27, 0
      %p157 = por %p155, %p156
      %p158 = scmp.ne.s32.totalorder %s144, %s145
      %p159 = scmp.eq.s32.totalorder %s28, 1
      %p160 = por %p158, %p159
      %p162 = scmp.ne.s32.totalorder %s145, %s161
      %p163 = scmp.eq.s32.totalorder %s28, 0
      %p164 = por %p162, %p163
      %p165 = scmp.le.s32.totalorder 1, %s22
      %p166 = scmp.lt.s32.totalorder %s22, 3
      %p167 = pnand %p165, %p166
      %p168 = pneg %p167
      // Predicated region
      $region9: #{tpu_custom_call.1} parent=5 // pred_check
        _
      $region10: #{tpu_custom_call.1} parent=5 // pred_check_branch
        %170 = sbr.rel (%p167) target = $region12
      $region11: #{tpu_custom_call.1} parent=5 // pred_region
        %s171 = ssub.s32 %s22, 1
      $region12: #{tpu_custom_call.1} parent=5 // pred_fallthru
        _
      %p172 = scmp.lt.s32.totalorder %s22, 2
      // Predicated region
      $region13: #{tpu_custom_call.1} parent=5 // pred_check
        %p173 = pneg %p172
      $region14: #{tpu_custom_call.1} parent=5 // pred_check_branch
        %175 = sbr.rel (%p173) target = $region16
      $region15: #{tpu_custom_call.1} parent=5 // pred_region
        // Predicated region
        $region17: #{tpu_custom_call.1} parent=15 // pred_check
          %p176 = pneg %p65
        $region18: #{tpu_custom_call.1} parent=15 // pred_check_branch
          %178 = sbr.rel (%p176) target = $region20
        $region19: #{tpu_custom_call.1} parent=15 // pred_region
          %s179 = sand.u32 %s55, 1
          %s180 = scalar_lea.sflag [#allocation3], %s179
          %s181 = sand.u32 %s55, 1
          %s182 = smul.addr %s181, 8
          %s183 = scalar_lea.vmem [#allocation2], %s182
          %s184 = sadd.s32 %s29, %s31
          %s186 = ssub.s32 128, 128
          %187 = vsyncadd %s180, %s186
          %s188 = smul.addr %s30, 2
          %s189 = sadd.s32 %s184, %s188
          %s190 = smul.addr %s189, 128
          %s191 = scalar_lea.hbm %s0, %s190
          %s193 = sshll.u32 %s183, 4
          %s194 = int_to_ptr.vmem [resolvable:$true] %s193
          %196 = dma.hbm_to_vmem [thread:$0]  %s191, 128, %s194, %s180
        $region20: #{tpu_custom_call.1} parent=15 // pred_fallthru
          _
        // Predicated region
        $region21: #{tpu_custom_call.1} parent=15 // pred_check
          %p197 = pneg %p95
        $region22: #{tpu_custom_call.1} parent=15 // pred_check_branch
          %199 = sbr.rel (%p197) target = $region24
        $region23: #{tpu_custom_call.1} parent=15 // pred_region
          %s200 = sand.u32 %s85, 1
          %s201 = scalar_lea.sflag [#allocation6], %s200
          %s202 = sand.u32 %s85, 1
          %s203 = smul.addr %s202, 8
          %s204 = scalar_lea.vmem [#allocation5], %s203
          %s205 = sadd.s32 %s29, %s31
          %s207 = ssub.s32 128, 128
          %208 = vsyncadd %s201, %s207
          %s209 = smul.addr %s30, 2
          %s210 = sadd.s32 %s205, %s209
          %s211 = smul.addr %s210, 128
          %s212 = scalar_lea.hbm %s1, %s211
          %s214 = sshll.u32 %s204, 4
          %s215 = int_to_ptr.vmem [resolvable:$true] %s214
          %217 = dma.hbm_to_vmem [thread:$0]  %s212, 128, %s215, %s201
        $region24: #{tpu_custom_call.1} parent=15 // pred_fallthru
          _
      $region16: #{tpu_custom_call.1} parent=5 // pred_fallthru
        _
      %p218 = scmp.le.s32.totalorder 1, %s22
      %p219 = scmp.lt.s32.totalorder %s22, 3
      %p220 = pnand %p218, %p219
      %p221 = pneg %p220
      // Predicated region
      $region25: #{tpu_custom_call.1} parent=5 // pred_check
        _
      $region26: #{tpu_custom_call.1} parent=5 // pred_check_branch
        %223 = sbr.rel (%p220) target = $region28
      $region27: #{tpu_custom_call.1} parent=5 // pred_region
        %s224 = ssub.s32 %s22, 1
        %s225 = sand.u32 %s58, 1
        %s226 = scalar_lea.sflag [#allocation3], %s225
        %s227 = sand.u32 %s58, 1
        %s228 = smul.addr %s227, 8
        %s229 = scalar_lea.vmem [#allocation2], %s228
        // Predicated region
        $region29: #{tpu_custom_call.1} parent=27 // pred_check
          %p230 = pneg %p71
        $region30: #{tpu_custom_call.1} parent=27 // pred_check_branch
          %232 = sbr.rel (%p230) target = $region32
        $region31: #{tpu_custom_call.1} parent=27 // pred_region
          %233 = dma.done %s226, 128
        $region32: #{tpu_custom_call.1} parent=27 // pred_fallthru
          _
        %s234 = sand.u32 %s88, 1
        %s235 = scalar_lea.sflag [#allocation6], %s234
        %s236 = sand.u32 %s88, 1
        %s237 = smul.addr %s236, 8
        %s238 = scalar_lea.vmem [#allocation5], %s237
        // Predicated region
        $region33: #{tpu_custom_call.1} parent=27 // pred_check
          %p239 = pneg %p101
        $region34: #{tpu_custom_call.1} parent=27 // pred_check_branch
          %241 = sbr.rel (%p239) target = $region36
        $region35: #{tpu_custom_call.1} parent=27 // pred_region
          %242 = dma.done %s235, 128
        $region36: #{tpu_custom_call.1} parent=27 // pred_fallthru
          _
        %s243 = sand.u32 %s58, 1
        %s244 = scalar_lea.sflag [#allocation3], %s243
        %s245 = sand.u32 %s58, 1
        %s246 = smul.addr %s245, 8
        %s247 = scalar_lea.vmem [#allocation2], %s246
        %p248 = pneg %p71
        %p249 = pneg %p68
        %s250 = sand.u32 %s88, 1
        %s251 = scalar_lea.sflag [#allocation6], %s250
        %s252 = sand.u32 %s88, 1
        %s253 = smul.addr %s252, 8
        %s254 = scalar_lea.vmem [#allocation5], %s253
        %p255 = pneg %p101
        %p256 = pneg %p98
        %p257 = pneg %p129
        %p258 = pneg %p126
        %s259 = sand.u32 %s116, 1
        %s260 = scalar_lea.sflag [#allocation4], %s259
        %s261 = sand.u32 %s116, 1
        %s262 = smul.addr %s261, 8
        %s263 = scalar_lea.vmem [#allocation7], %s262
        %p264 = pneg %p157
        %p265 = pneg %p154
        %s266 = sand.u32 %s144, 1
        %s267 = scalar_lea.sflag [#allocation9], %s266
        %s268 = sand.u32 %s144, 1
        %s269 = smul.addr %s268, 8
        %s270 = scalar_lea.vmem [#allocation8], %s269
        %s271 = sadd.s32 %s32, %s34
        %s272 = sadd.s32 %s32, %s34
        %p273 = scmp.eq.s32.totalorder %s34, 0
        // Predicated region
        $region37: #{tpu_custom_call.1} parent=27 // pred_check
          %p274 = pneg %p273
        $region38: #{tpu_custom_call.1} parent=27 // pred_check_branch
          %276 = sbr.rel (%p274) target = $region40
        $region39: #{tpu_custom_call.1} parent=27 // pred_region
          %277 = vst [vmem:[%s263] sm:$0xff] 0.0
          %278 = vst [vmem:[%s270] sm:$0xff] 0.0
        $region40: #{tpu_custom_call.1} parent=27 // pred_fallthru
          _
        %v279 = vld [vmem:[%s263] sm:$0xff]
        %v280 = vld [vmem:[%s270] sm:$0xff]
        %v281 = vld [vmem:[%s238] sm:$0xff]
        %v282 = vld [vmem:[%s229] sm:$0xff]
        %v283 = vsub.f32 %v282, %v281
        %v284 = vmul.f32 %v281, %v281
        %v285 = vadd.f32 %v279, %v284
        %v286 = vmul.f32 %v283, %v283
        %v287 = vadd.f32 %v280, %v286
        %288 = vst [vmem:[%s263] sm:$0xff] %v285
        %289 = vst [vmem:[%s270] sm:$0xff] %v287
        %s290 = sand.u32 %s116, 1
        %s291 = scalar_lea.sflag [#allocation4], %s290
        %s292 = sand.u32 %s116, 1
        %s293 = smul.addr %s292, 8
        %s294 = scalar_lea.vmem [#allocation7], %s293
        %s295 = sand.u32 %s144, 1
        %s296 = scalar_lea.sflag [#allocation9], %s295
        %s297 = sand.u32 %s144, 1
        %s298 = smul.addr %s297, 8
        %s299 = scalar_lea.vmem [#allocation8], %s298
        // Predicated region
        $region41: #{tpu_custom_call.1} parent=27 // pred_check
          %p300 = pneg %p126
        $region42: #{tpu_custom_call.1} parent=27 // pred_check_branch
          %302 = sbr.rel (%p300) target = $region44
        $region43: #{tpu_custom_call.1} parent=27 // pred_region
          %s304 = ssub.s32 128, 128
          %305 = vsyncadd %s291, %s304
          %s306 = sadd.s32 %s33, %s32
          %s307 = smul.addr %s306, 128
          %s308 = scalar_lea.hbm %s2, %s307
          %s310 = sshll.u32 %s294, 4
          %s311 = int_to_ptr.vmem [resolvable:$true] %s310
          %313 = dma.vmem_to_hbm [thread:$0]  %s311, 128, %s308, %s291
        $region44: #{tpu_custom_call.1} parent=27 // pred_fallthru
          _
        // Predicated region
        $region45: #{tpu_custom_call.1} parent=27 // pred_check
          %p314 = pneg %p154
        $region46: #{tpu_custom_call.1} parent=27 // pred_check_branch
          %316 = sbr.rel (%p314) target = $region48
        $region47: #{tpu_custom_call.1} parent=27 // pred_region
          %s318 = ssub.s32 128, 128
          %319 = vsyncadd %s296, %s318
          %s320 = sadd.s32 %s33, %s32
          %s321 = smul.addr %s320, 128
          %s322 = scalar_lea.hbm %s3, %s321
          %s324 = sshll.u32 %s299, 4
          %s325 = int_to_ptr.vmem [resolvable:$true] %s324
          %327 = dma.vmem_to_hbm [thread:$0]  %s325, 128, %s322, %s296
        $region48: #{tpu_custom_call.1} parent=27 // pred_fallthru
          _
      $region28: #{tpu_custom_call.1} parent=5 // pred_fallthru
        _
      %p328 = scmp.le.s32.totalorder 2, %s22
      // Predicated region
      $region49: #{tpu_custom_call.1} parent=5 // pred_check
        %p329 = pneg %p328
      $region50: #{tpu_custom_call.1} parent=5 // pred_check_branch
        %331 = sbr.rel (%p329) target = $region52
      $region51: #{tpu_custom_call.1} parent=5 // pred_region
        %s332 = ssub.s32 %s22, 2
        // Predicated region
        $region53: #{tpu_custom_call.1} parent=51 // pred_check
          %p333 = pneg %p132
        $region54: #{tpu_custom_call.1} parent=51 // pred_check_branch
          %335 = sbr.rel (%p333) target = $region56
        $region55: #{tpu_custom_call.1} parent=51 // pred_region
          %s336 = sand.u32 %s117, 1
          %s337 = scalar_lea.sflag [#allocation4], %s336
          %s338 = sand.u32 %s117, 1
          %s339 = smul.addr %s338, 8
          %s340 = scalar_lea.vmem [#allocation7], %s339
          %341 = dma.done %s337, 128
        $region56: #{tpu_custom_call.1} parent=51 // pred_fallthru
          _
        // Predicated region
        $region57: #{tpu_custom_call.1} parent=51 // pred_check
          %p342 = pneg %p160
        $region58: #{tpu_custom_call.1} parent=51 // pred_check_branch
          %344 = sbr.rel (%p342) target = $region60
        $region59: #{tpu_custom_call.1} parent=51 // pred_region
          %s345 = sand.u32 %s145, 1
          %s346 = scalar_lea.sflag [#allocation9], %s345
          %s347 = sand.u32 %s145, 1
          %s348 = smul.addr %s347, 8
          %s349 = scalar_lea.vmem [#allocation8], %s348
          %350 = dma.done %s346, 128
        $region60: #{tpu_custom_call.1} parent=51 // pred_fallthru
          _
      $region52: #{tpu_custom_call.1} parent=5 // pred_fallthru
        _
    $region6: #{tpu_custom_call.1} parent=1 // loop_footer
      %s26 = sadd.s32 1, %s22
    $region7: #{tpu_custom_call.1} parent=1 // loop_footer_branch
      %21 = sbr.rel target = $region3
    $region8: #{tpu_custom_call.1} parent=1 // loop_exit
      _
    %351 = vsyncpa [#allocation3], 1
    %s352 = scalar_lea.sflag [#allocation3], 1
    %353 = vsyncpa %s352, 1
    %354 = vsyncpa [#allocation6], 1
    %s355 = scalar_lea.sflag [#allocation6], 1
    %356 = vsyncpa %s355, 1
    %357 = vsyncpa [#allocation4], 1
    %s358 = scalar_lea.sflag [#allocation4], 1
    %359 = vsyncpa %s358, 1
    %360 = vsyncpa [#allocation9], 1
    %s361 = scalar_lea.sflag [#allocation9], 1
    %362 = vsyncpa %s361, 1

</llo_original>
